<compile_context>
chip_gen: v5e
topology: v5e:2x2
jax: 0.10.0
libtpu: 0.0.40
codegen_flags: <defaults>
</compile_context>

<pallas_src>
import functools

import jax
import jax.numpy as jnp
from jax.experimental import pallas as pl
from jax.experimental.pallas import tpu as pltpu


# ------------------------------ helpers -------------------------------------
def _largest_divisor_leq(n, cap):
    for d in range(min(n, cap), 0, -1):
        if n % d == 0:
            return d
    return 1


def _choose_time_tile(T, cap=32):
    """Timesteps per grid chunk.  Prefers an exact divisor of T; falls back to
    `cap` with zero padding (avoids the Tb=1 cliff for prime T)."""
    if T <= cap:
        return T
    d = _largest_divisor_leq(T, cap)
    return d if d >= cap // 2 else cap


def _choose_row_tile(R):
    """Row tile for the input projection (VMEM-safe on v7x for long sequences)."""
    if R <= 2048:
        return R
    for rb in (512, 256, 128, 64, 32, 16, 8):
        if R % rb == 0:
            return rb
    return R


# ----------------------------------------------------------------------------
# Kernel 1: fused input projection for BOTH directions in one MXU pass.
#   gx = x2 @ [W_ih_fwd^T | W_ih_rev^T] + [b_fwd | b_rev]
# Row-tiled over T*B with a "parallel" grid; output is lane-dense (D*4H wide).
# ----------------------------------------------------------------------------
def _input_proj_kernel(x_ref, w_ref, b_ref, out_ref):
    out_ref[...] = (
        jnp.dot(x_ref[...], w_ref[...], preferred_element_type=jnp.float32)
        + b_ref[...]
    ).astype(out_ref.dtype)


def _input_projection(x2, w_cat, b_cat):
    R, I = x2.shape
    G = w_cat.shape[1]
    Rb = _choose_row_tile(R)
    return pl.pallas_call(
        _input_proj_kernel,
        out_shape=jax.ShapeDtypeStruct((R, G), jnp.float32),
        grid_spec=pltpu.PrefetchScalarGridSpec(
            num_scalar_prefetch=0,
            grid=(R // Rb,),
            in_specs=[
                pl.BlockSpec((Rb, I), lambda r: (r, 0)),   # x rows
                pl.BlockSpec((I, G), lambda r: (0, 0)),    # fused W_ih^T (resident)
                pl.BlockSpec((1, G), lambda r: (0, 0)),    # fused bias (resident)
            ],
            out_specs=pl.BlockSpec((Rb, G), lambda r: (r, 0)),
        ),
        compiler_params=pltpu.CompilerParams(
            dimension_semantics=("parallel",)),
    )(x2, w_cat, b_cat)


# ----------------------------------------------------------------------------
# Kernel 2: fused (fwd + rev) chunked serial recurrence.
# grid = (n_chunks,) "arbitrary".  Per chunk the kernel gets the forward gates
# block at chunk c and the reverse gates block at chunk n_chunks-1-c (the rev
# direction scans time back-to-front).  h/c carries for both directions live
# in VMEM scratch; the (T_pad, B, D*H) memory bank stays resident (constant
# block index) and each chunk writes its rows directly -- no wrapper-side
# reverse/concat passes.
# ----------------------------------------------------------------------------
def _lstm_recurrent_kernel(*refs, hidden, tb, n_chunks, rem, bidirectional):
    if bidirectional:
        gxf_ref, gxr_ref, whh_ref, out_ref, hN_ref, cN_ref, h_sc, c_sc = refs
    else:
        gxf_ref, whh_ref, out_ref, hN_ref, cN_ref, h_sc, c_sc = refs
        gxr_ref = None

    H = hidden
    n_pad = tb - rem                       # 0 unless T was padded
    cidx = pl.program_id(0)
    is_first = cidx == 0
    is_last = cidx == n_chunks - 1

    @pl.when(is_first)
    def _init():
        h_sc[...] = jnp.zeros_like(h_sc)
        c_sc[...] = jnp.zeros_like(c_sc)

    whh = whh_ref[...]                     # (D*H, D*4H) block-diag W_hh^T (resident)
    gxf = gxf_ref[...]                     # (Tb, B, 4H) fwd gates, time ascending
    gxr = gxr_ref[...] if bidirectional else None

    hc = h_sc[...]                         # (B, D*H) carry
    cc = c_sc[...]
    if bidirectional:
        h_f, h_r = hc[:, :H], hc[:, H:]
        c_f, c_r = cc[:, :H], cc[:, H:]
    else:
        h_f, c_f = hc, cc
        h_r = c_r = None

    fwd_outs = []
    rev_outs = [None] * tb
    h_f_fin = c_f_fin = None

    # Fully-unrolled fused recurrence: step i advances the forward direction at
    # in-chunk time i and (if brnn) the reverse direction at in-chunk time
    # tb-1-i of the mirrored chunk, sharing one MXU matmul plus one full-width
    # sigmoid and one full-width tanh over all gates of both directions.
    for i in range(tb):
        j = tb - 1 - i                     # reverse-direction in-chunk index
        if bidirectional:
            h_in = jnp.concatenate([h_f, h_r], axis=-1)          # (B, 2H)
            gx_i = jnp.concatenate([gxf[i], gxr[j]], axis=-1)     # (B, 8H)
        else:
            h_in = h_f
            gx_i = gxf[i]
        gates = gx_i + jnp.dot(h_in, whh, preferred_element_type=jnp.float32)
        sg = jax.nn.sigmoid(gates)
        tg = jnp.tanh(gates)

        # forward direction (PyTorch gate order i, f, g, o)
        c_f = sg[:, 1 * H:2 * H] * c_f + sg[:, 0 * H:1 * H] * tg[:, 2 * H:3 * H]
        h_f = sg[:, 3 * H:4 * H] * jnp.tanh(c_f)
        fwd_outs.append(h_f)
        if i == rem - 1:                   # last *real* fwd timestep of a chunk
            h_f_fin, c_f_fin = h_f, c_f

        if bidirectional:
            c_r_new = (sg[:, 5 * H:6 * H] * c_r
                       + sg[:, 4 * H:5 * H] * tg[:, 6 * H:7 * H])
            h_r_new = sg[:, 7 * H:8 * H] * jnp.tanh(c_r_new)
            if i < n_pad:
                # padded timestep for the reverse direction (it scans time
                # back-to-front, so padding is hit only in the first grid
                # chunk); keep the carry untouched there.
                c_r_new = jnp.where(is_first, c_r, c_r_new)
                h_r_new = jnp.where(is_first, h_r, h_r_new)
            c_r, h_r = c_r_new, h_r_new
            rev_outs[j] = h_r

    # persist carries for the next chunk
    if bidirectional:
        h_sc[...] = jnp.concatenate([h_f, h_r], axis=-1)
        c_sc[...] = jnp.concatenate([c_f, c_r], axis=-1)
    else:
        h_sc[...] = h_f
        c_sc[...] = c_f

    # Bulk stores straight into the (T_pad, B, D*H) memory bank.
    out_f = jnp.stack(fwd_outs)                        # (Tb, B, H)
    if bidirectional:
        out_r = jnp.stack(rev_outs)                    # (Tb, B, H) forward-time order
        if n_chunks == 1:
            out_ref[...] = jnp.concatenate([out_f, out_r], axis=-1)
        else:
            out_ref[pl.ds(cidx * tb, tb), :, 0:H] = out_f
            out_ref[pl.ds((n_chunks - 1 - cidx) * tb, tb), :, H:2 * H] = out_r
    else:
        if n_chunks == 1:
            out_ref[...] = out_f
        else:
            out_ref[pl.ds(cidx * tb, tb), :, :] = out_f

    @pl.when(is_last)
    def _finalize():
        if bidirectional:
            hN_ref[...] = jnp.concatenate([h_f_fin, h_r], axis=-1)
            cN_ref[...] = jnp.concatenate([c_f_fin, c_r], axis=-1)
        else:
            hN_ref[...] = h_f_fin
            cN_ref[...] = c_f_fin


# ----------------------------------------------------------------------------
# One LSTM layer (both directions fused into a single projection + a single
# recurrent pallas_call).
# ----------------------------------------------------------------------------
def lstm_layer(x, layer_params, bidirectional, time_tile_cap=32):
    """x: (T, B, I) f32.  layer_params: per-direction (w_ih, w_hh, b_ih, b_hh)
    in PyTorch layout (4H, I) / (4H, H) / (4H,) / (4H,).
    Returns (y (T, B, D*H), hN (B, D*H), cN (B, D*H))."""
    T, B, I = x.shape
    D = 2 if bidirectional else 1
    H = layer_params[0][1].shape[1]        # w_hh: (4H, H)
    G = D * 4 * H

    # fused-direction weights ------------------------------------------------
    if bidirectional:
        wif, whf, bif, bhf = layer_params[0]
        wir, whr, bir, bhr = layer_params[1]
        w_cat = jnp.concatenate(
            [jnp.asarray(wif, jnp.float32).T, jnp.asarray(wir, jnp.float32).T],
            axis=1)                                                # (I, 8H)
        b_cat = jnp.concatenate(
            [jnp.asarray(bif + bhf, jnp.float32),
             jnp.asarray(bir + bhr, jnp.float32)])[None, :]        # (1, 8H)
        whh_bd = jnp.zeros((2 * H, 8 * H), jnp.float32)            # block-diag W_hh^T
        whh_bd = whh_bd.at[:H, :4 * H].set(jnp.asarray(whf, jnp.float32).T)
        whh_bd = whh_bd.at[H:, 4 * H:].set(jnp.asarray(whr, jnp.float32).T)
    else:
        wif, whf, bif, bhf = layer_params[0]
        w_cat = jnp.asarray(wif, jnp.float32).T                    # (I, 4H)
        b_cat = jnp.asarray(bif + bhf, jnp.float32)[None, :]       # (1, 4H)
        whh_bd = jnp.asarray(whf, jnp.float32).T                   # (H, 4H)

    # time chunking ------------------------------------------------------------
    Tb = _choose_time_tile(T, time_tile_cap)
    n_chunks = -(-T // Tb)
    T_pad = n_chunks * Tb
    rem = T - (n_chunks - 1) * Tb          # real timesteps in the last chunk

    xp = x if T_pad == T else jnp.pad(x, ((0, T_pad - T), (0, 0), (0, 0)))
    x2 = xp.reshape(T_pad * B, I).astype(jnp.float32)

    # 1) bulk fused input projection (bias folded in)
    gx = _input_projection(x2, w_cat, b_cat).reshape(T_pad, B, G)

    # 2) fused serial recurrence
    if bidirectional:
        in_specs = [
            pl.BlockSpec((Tb, B, 4 * H), lambda c: (c, 0, 0)),                  # fwd gates chunk
            pl.BlockSpec((Tb, B, 4 * H), lambda c: (n_chunks - 1 - c, 0, 1)),   # rev gates (mirrored chunk)
            pl.BlockSpec((D * H, G), lambda c: (0, 0)),                         # W_hh^T (resident)
        ]
        operands = (gx, gx, whh_bd)
    else:
        in_specs = [
            pl.BlockSpec((Tb, B, 4 * H), lambda c: (c, 0, 0)),
            pl.BlockSpec((H, G), lambda c: (0, 0)),
        ]
        operands = (gx, whh_bd)

    out, hN, cN = pl.pallas_call(
        functools.partial(_lstm_recurrent_kernel, hidden=H, tb=Tb,
                          n_chunks=n_chunks, rem=rem,
                          bidirectional=bidirectional),
        out_shape=(jax.ShapeDtypeStruct((T_pad, B, D * H), jnp.float32),
                   jax.ShapeDtypeStruct((B, D * H), jnp.float32),
                   jax.ShapeDtypeStruct((B, D * H), jnp.float32)),
        grid_spec=pltpu.PrefetchScalarGridSpec(
            num_scalar_prefetch=0,
            grid=(n_chunks,),
            in_specs=in_specs,
            out_specs=(
                pl.BlockSpec((T_pad, B, D * H), lambda c: (0, 0, 0)),  # memory bank (resident)
                pl.BlockSpec((B, D * H), lambda c: (0, 0)),            # final h
                pl.BlockSpec((B, D * H), lambda c: (0, 0)),            # final c
            ),
            scratch_shapes=[
                pltpu.VMEM((B, D * H), jnp.float32),   # h carry
                pltpu.VMEM((B, D * H), jnp.float32),   # c carry
            ],
        ),
        compiler_params=pltpu.CompilerParams(
            dimension_semantics=("arbitrary",)),
    )(*operands)

    y = out if T_pad == T else out[:T]
    return y, hN, cN


# ----------------------------------------------------------------------------
# Encoder.forward : multi-layer (bi)directional LSTM
# ----------------------------------------------------------------------------
def encoder_forward(params, inputs, num_layers, bidirectional):
    x = jnp.asarray(inputs, jnp.float32)
    D = 2 if bidirectional else 1
    h_finals, c_finals = [], []
    for layer in range(num_layers):
        layer_params = [params[(layer, d)] for d in range(D)]
        x, hN, cN = lstm_layer(x, layer_params, bidirectional)
        H = hN.shape[-1] // D
        for d in range(D):
            h_finals.append(hN[:, d * H:(d + 1) * H])
            c_finals.append(cN[:, d * H:(d + 1) * H])
    memory_bank = x
    encoder_final = (jnp.stack(h_finals, axis=0), jnp.stack(c_finals, axis=0))
    return memory_bank, encoder_final


# ----------------------------------------------------------------------------
# Pure-JAX reference (mirrors torch.nn.LSTM math) for the correctness check.
# ----------------------------------------------------------------------------
def _ref_lstm_dir(x, w_ih, w_hh, b_ih, b_hh, reverse):
    T, B, _ = x.shape
    H = w_hh.shape[1]
    h = jnp.zeros((B, H), jnp.float32)
    c = jnp.zeros((B, H), jnp.float32)
    outs = [None] * T
    order = range(T - 1, -1, -1) if reverse else range(T)
    for t in order:
        gates = x[t] @ w_ih.T + h @ w_hh.T + b_ih + b_hh
        i = jax.nn.sigmoid(gates[:, 0 * H:1 * H])
        f = jax.nn.sigmoid(gates[:, 1 * H:2 * H])
        g = jnp.tanh(gates[:, 2 * H:3 * H])
        o = jax.nn.sigmoid(gates[:, 3 * H:4 * H])
        c = f * c + i * g
        h = o * jnp.tanh(c)
        outs[t] = h
    return jnp.stack(outs), h, c


def _ref_encoder(params, inputs, num_layers, bidirectional):
    x = inputs
    h_finals, c_finals = [], []
    dirs = (False, True) if bidirectional else (False,)
    for layer in range(num_layers):
        dir_outs = []
        for d, rev in enumerate(dirs):
            w_ih, w_hh, b_ih, b_hh = params[(layer, d)]
            out, hN, cN = _ref_lstm_dir(x, w_ih, w_hh, b_ih, b_hh, rev)
            dir_outs.append(out)
            h_finals.append(hN)
            c_finals.append(cN)
        x = jnp.concatenate(dir_outs, axis=-1) if len(dir_outs) > 1 else dir_outs[0]
    return x, (jnp.stack(h_finals, axis=0), jnp.stack(c_finals, axis=0))


# ----------------------------------------------------------------------------
# Parameter init (PyTorch default: U(-1/sqrt(H), 1/sqrt(H)))
# ----------------------------------------------------------------------------
def init_lstm_params(key, input_size, hidden, num_layers, bidirectional):
    params = {}
    num_dirs = 2 if bidirectional else 1
    k = 1.0 / jnp.sqrt(hidden)
    for layer in range(num_layers):
        in_sz = input_size if layer == 0 else hidden * num_dirs
        for d in range(num_dirs):
            key, k1, k2, k3, k4 = jax.random.split(key, 5)
            w_ih = jax.random.uniform(k1, (4 * hidden, in_sz), jnp.float32, -k, k)
            w_hh = jax.random.uniform(k2, (4 * hidden, hidden), jnp.float32, -k, k)
            b_ih = jax.random.uniform(k3, (4 * hidden,), jnp.float32, -k, k)
            b_hh = jax.random.uniform(k4, (4 * hidden,), jnp.float32, -k, k)
            params[(layer, d)] = (w_ih, w_hh, b_ih, b_hh)
    return params


if __name__ == "__main__":
    # config: encoder_input_size=16, d_hidden=32, num_layers=2,
    #         lstm_dropout=0.0, brnn=True
    encoder_input_size = 16
    d_hidden = 32
    num_layers = 2
    brnn = True

    seq_len = 8
    batch_size = 2

    root = jax.random.PRNGKey(0)
    k_in, k_par = jax.random.split(root)
    inputs = jax.random.normal(k_in, (seq_len, batch_size, encoder_input_size),
                               jnp.float32)
    params = init_lstm_params(k_par, encoder_input_size, d_hidden,
                              num_layers, brnn)

    memory_bank, (h_n, c_n) = encoder_forward(params, inputs, num_layers, brnn)
    memory_bank = jax.block_until_ready(memory_bank)
    h_n = jax.block_until_ready(h_n)
    c_n = jax.block_until_ready(c_n)

    # shape checks (PyTorch nn.LSTM conventions)
    num_dirs = 2 if brnn else 1
    assert memory_bank.shape == (seq_len, batch_size, num_dirs * d_hidden)
    assert h_n.shape == (num_layers * num_dirs, batch_size, d_hidden)
    assert c_n.shape == (num_layers * num_dirs, batch_size, d_hidden)

    # numerical check against a pure-JAX reference LSTM
    ref_mb, (ref_h, ref_c) = _ref_encoder(params, inputs, num_layers, brnn)
    assert jnp.allclose(memory_bank, ref_mb, rtol=1e-4, atol=1e-4)
    assert jnp.allclose(h_n, ref_h, rtol=1e-4, atol=1e-4)
    assert jnp.allclose(c_n, ref_c, rtol=1e-4, atol=1e-4)

    print("KERNEL_OK")
</pallas_src>

<mosaic_0001>
module attributes {stable_mosaic.version = 11 : i64} {
  func.func @_input_proj_kernel(%arg0: i32, %arg1: memref<16x16xf32, #tpu.memory_space<vmem>>, %arg2: memref<16x256xf32, #tpu.memory_space<vmem>>, %arg3: memref<1x256xf32, #tpu.memory_space<vmem>>, %arg4: memref<16x256xf32, #tpu.memory_space<vmem>>) attributes {dimension_semantics = [#tpu.dimension_semantics<parallel>], iteration_bounds = array<i64: 1>, scalar_prefetch = 0 : i64, scratch_operands = 0 : i64, tpu.core_type = #tpu.core_type<tc>, window_params = [{transform_indices = @transform_0, window_bounds = array<i64: 16, 16>}, {pipeline_mode = #tpu.pipeline_mode<synchronous>, transform_indices = @transform_1, window_bounds = array<i64: 16, 256>}, {pipeline_mode = #tpu.pipeline_mode<synchronous>, transform_indices = @transform_2, window_bounds = array<i64: 1, 256>}, {transform_indices = @transform_3, window_bounds = array<i64: 16, 256>}]} {
    %c0 = arith.constant 0 : index
    %c0_0 = arith.constant 0 : index
    %0 = vector.load %arg1[%c0, %c0_0] : memref<16x16xf32, #tpu.memory_space<vmem>>, vector<16x16xf32>
    %c0_1 = arith.constant 0 : index
    %c0_2 = arith.constant 0 : index
    %1 = vector.load %arg2[%c0_1, %c0_2] : memref<16x256xf32, #tpu.memory_space<vmem>>, vector<16x256xf32>
    %cst = arith.constant dense<0.000000e+00> : vector<16x256xf32>
    %2 = tpu.matmul %0, %1, %cst {dimension_numbers = #tpu.dot_dimension_numbers<[1], [0], [0], [1], [0, 0, 1, 1], [], []>} : vector<16x16xf32>, vector<16x256xf32>, vector<16x256xf32> -> vector<16x256xf32>
    %c0_3 = arith.constant 0 : index
    %c0_4 = arith.constant 0 : index
    %3 = vector.load %arg3[%c0_3, %c0_4] : memref<1x256xf32, #tpu.memory_space<vmem>>, vector<1x256xf32>
    %4 = vector.broadcast %3 : vector<1x256xf32> to vector<16x256xf32>
    %5 = arith.addf %2, %4 : vector<16x256xf32>
    %c0_5 = arith.constant 0 : index
    %c0_6 = arith.constant 0 : index
    %6 = vector.load %arg4[%c0_5, %c0_6] : memref<16x256xf32, #tpu.memory_space<vmem>>, vector<16x256xf32>
    tpu.vector_store %arg4[%c0_5, %c0_6], %5 {strides = array<i32>} : memref<16x256xf32, #tpu.memory_space<vmem>>, vector<16x256xf32>,
    return
  }
  func.func @transform_0(%arg0: i32) -> (i32, i32) {
    %c0_i32 = arith.constant 0 : i32
    %c0_i32_0 = arith.constant 0 : i32
    return %arg0, %c0_i32 : i32, i32
  }
  func.func @transform_1(%arg0: i32) -> (i32, i32) {
    %c0_i32 = arith.constant 0 : i32
    %c0_i32_0 = arith.constant 0 : i32
    %c0_i32_1 = arith.constant 0 : i32
    return %c0_i32, %c0_i32_0 : i32, i32
  }
  func.func @transform_2(%arg0: i32) -> (i32, i32) {
    %c0_i32 = arith.constant 0 : i32
    %c0_i32_0 = arith.constant 0 : i32
    %c0_i32_1 = arith.constant 0 : i32
    return %c0_i32, %c0_i32_0 : i32, i32
  }
  func.func @transform_3(%arg0: i32) -> (i32, i32) {
    %c0_i32 = arith.constant 0 : i32
    %c0_i32_0 = arith.constant 0 : i32
    return %arg0, %c0_i32 : i32, i32
  }
}

</mosaic_0001>

<llo_original>
// kernel: tpu_custom_call.1
$region0: #{tpu_custom_call.1}
  #allocation0 [shape = 'u32[]', space=smem, size = 0x4, offset = 0x4, fixed_abs, tag = 'smem constant byte address 0x4 - core index']
  #allocation1 [shape = 'u32[72,128]{1,0:T(1,128)}', space=vmem, size = 0x9000, scoped, tag = 'internal scratch']
  %s0 = inlined_call_operand.hbm [shape: f32[16,16], index: 0, kind: input, shape index: {}]
  %s1 = inlined_call_operand.hbm [shape: f32[16,256], index: 1, kind: input, shape index: {}]
  %s2 = inlined_call_operand.hbm [shape: f32[1,256], index: 2, kind: input, shape index: {}]
  %s3 = inlined_call_operand.hbm [shape: f32[16,256], index: 3, kind: output, shape index: {}]
  %s4 = sld [smem:[#allocation0]]
  $region34: #{tpu_custom_call.1} parent=0
    _
  %s6 = ssub.s32 1, %s4
  %s7 = scalar_select 0, %s6, %s4
  $region1: #{tpu_custom_call.1} parent=0
    #allocation2 [shape = 'u8[8192]{0}', space=vmem, size = 0x2000, scoped, tag = 'input window, operand 0, single buffered']
    #allocation3 [shape = 's32[1]{0}', space=sflag, size = 0x4, scoped, tag = 'scoped memory for tpu_custom_call.1']
    #allocation4 [shape = 's32[1]{0}', space=sflag, size = 0x4, scoped, tag = 'scoped memory for tpu_custom_call.1']
    #allocation5 [shape = 'u8[16384]{0}', space=vmem, size = 0x4000, scoped, tag = 'input window, operand 1, single buffered']
    #allocation6 [shape = 's32[1]{0}', space=sflag, size = 0x4, scoped, tag = 'scoped memory for tpu_custom_call.1']
    #allocation7 [shape = 'u8[1024]{0}', space=vmem, size = 0x400, scoped, tag = 'input window, operand 2, single buffered']
    #allocation8 [shape = 'u8[16384]{0}', space=vmem, size = 0x4000, scoped, tag = 'output window, operand 0, single buffered']
    %8 = vsyncpa [#allocation3], 0
    %9 = vsyncpa [#allocation6], 0
    %10 = vsyncpa [#allocation4], 0
    // Predicated region
    $region2: #{tpu_custom_call.1} parent=1 // pred_check
      _
    $region3: #{tpu_custom_call.1} parent=1 // pred_check_branch
      %12 = sbr.rel (0) target = $region5
    $region4: #{tpu_custom_call.1} parent=1 // pred_region
      %14 = vsyncadd [#allocation3], 0
      %s15 = sshll.u32 %s0, 4
      %s16 = int_to_ptr.hbm [resolvable:$true] %s15
      %s17 = sshll.u32 [#allocation2], 4
      %s18 = int_to_ptr.vmem [resolvable:$true] %s17
      %23 = dma.hbm_to_vmem [thread:$0]  %s16, 256, %s18, [#allocation3], 128, 128, 8
    $region5: #{tpu_custom_call.1} parent=1 // pred_fallthru
      _
    // Predicated region
    $region6: #{tpu_custom_call.1} parent=1 // pred_check
      _
    $region7: #{tpu_custom_call.1} parent=1 // pred_check_branch
      %25 = sbr.rel (0) target = $region9
    $region8: #{tpu_custom_call.1} parent=1 // pred_region
      %27 = vsyncadd [#allocation6], 0
      %s28 = sshll.u32 %s1, 4
      %s29 = int_to_ptr.hbm [resolvable:$true] %s28
      %s30 = sshll.u32 [#allocation5], 4
      %s31 = int_to_ptr.vmem [resolvable:$true] %s30
      %36 = dma.hbm_to_vmem [thread:$0]  %s29, 512, %s31, [#allocation6], 256, 256, 16
    $region9: #{tpu_custom_call.1} parent=1 // pred_fallthru
      _
    // Predicated region
    $region10: #{tpu_custom_call.1} parent=1 // pred_check
      _
    $region11: #{tpu_custom_call.1} parent=1 // pred_check_branch
      %38 = sbr.rel (0) target = $region13
    $region12: #{tpu_custom_call.1} parent=1 // pred_region
      %40 = vsyncadd [#allocation6], 0
      %s42 = sshll.u32 %s2, 4
      %s43 = int_to_ptr.hbm [resolvable:$true] %s42
      %s44 = sshll.u32 [#allocation7], 4
      %s45 = int_to_ptr.vmem [resolvable:$true] %s44
      %47 = dma.hbm_to_vmem [thread:$0]  %s43, 32, %s45, [#allocation6]
    $region13: #{tpu_custom_call.1} parent=1 // pred_fallthru
      _
    // Predicated region
    $region14: #{tpu_custom_call.1} parent=1 // pred_check
      _
    $region15: #{tpu_custom_call.1} parent=1 // pred_check_branch
      %49 = sbr.rel (0) target = $region17
    $region16: #{tpu_custom_call.1} parent=1 // pred_region
      %51 = dma.done [#allocation3], 256
    $region17: #{tpu_custom_call.1} parent=1 // pred_fallthru
      _
    // Predicated region
    $region18: #{tpu_custom_call.1} parent=1 // pred_check
      _
    $region19: #{tpu_custom_call.1} parent=1 // pred_check_branch
      %53 = sbr.rel (0) target = $region21
    $region20: #{tpu_custom_call.1} parent=1 // pred_region
      %55 = dma.done [#allocation6], 512
    $region21: #{tpu_custom_call.1} parent=1 // pred_fallthru
      _
    // Predicated region
    $region22: #{tpu_custom_call.1} parent=1 // pred_check
      _
    $region23: #{tpu_custom_call.1} parent=1 // pred_check_branch
      %57 = sbr.rel (0) target = $region25
    $region24: #{tpu_custom_call.1} parent=1 // pred_region
      %59 = dma.done [#allocation6], 32
    $region25: #{tpu_custom_call.1} parent=1 // pred_fallthru
      _
    %v60 = vld [vmem:[#allocation2] sm:$0xff]
    %v61 = vld [vmem:[#allocation2 + $0x8] sm:$0xff]
    %v62 = vld [vmem:[#allocation5] sm:$0xff]
    %v63 = vld [vmem:[#allocation5 + $0x8] sm:$0xff]
    %v64 = vld [vmem:[#allocation5 + $0x10] sm:$0xff]
    %v65 = vld [vmem:[#allocation5 + $0x18] sm:$0xff]
    %v66 = vld [vmem:[#allocation7] sm:$0x3]
    %v68 = vperm.slane %v66, 0
    %v69 = vperm.slane %v66, 1
    %vm72 = vcmask 130048
    %v74 = vsel %vm72, %v60, 0
    %v77 = vsel %vm72, %v61, 0
    %79 = vmatpush.msra.mxu0 0.0
    %80 = vmatpush.msra.mxu0 0.0
    %81 = vmatpush.msra.mxu0 0.0
    %82 = vmatpush.msra.mxu0 0.0
    %83 = vmatpush.msra.mxu0 0.0
    %84 = vmatpush.msra.mxu0 0.0
    %85 = vmatpush.msra.mxu0 0.0
    %86 = vmatpush.msra.mxu0 0.0
    %87 = vmatpush.msra.mxu0 0.0
    %88 = vmatpush.msra.mxu0 0.0
    %89 = vmatpush.msra.mxu0 0.0
    %90 = vmatpush.msra.mxu0 0.0
    %91 = vmatpush.msra.mxu0 0.0
    %92 = vmatpush.msra.mxu0 0.0
    %93 = vmatpush.msra.mxu0 %v64
    %94 = vmatpush.msra.mxu0 %v62
    %95 = vmatmul.f32.gmra.mxu0 %v74
    %v96 = vpop.f32.mrf.mxu0
    %v97 = vadd.f32 %v68, %v96
    %98 = vmatmul.f32.gmra.mxu0 %v77
    %v99 = vpop.f32.mrf.mxu0
    %v100 = vadd.f32 %v68, %v99
    %101 = vdwg.mxu0
    %102 = vmatpush.msra.mxu0 0.0
    %103 = vmatpush.msra.mxu0 0.0
    %104 = vmatpush.msra.mxu0 0.0
    %105 = vmatpush.msra.mxu0 0.0
    %106 = vmatpush.msra.mxu0 0.0
    %107 = vmatpush.msra.mxu0 0.0
    %108 = vmatpush.msra.mxu0 0.0
    %109 = vmatpush.msra.mxu0 0.0
    %110 = vmatpush.msra.mxu0 0.0
    %111 = vmatpush.msra.mxu0 0.0
    %112 = vmatpush.msra.mxu0 0.0
    %113 = vmatpush.msra.mxu0 0.0
    %114 = vmatpush.msra.mxu0 0.0
    %115 = vmatpush.msra.mxu0 0.0
    %116 = vmatpush.msra.mxu0 %v65
    %117 = vmatpush.msra.mxu0 %v63
    %118 = vmatmul.f32.gmra.mxu0 %v74
    %v119 = vpop.f32.mrf.mxu0
    %v120 = vadd.f32 %v69, %v119
    %121 = vmatmul.f32.gmra.mxu0 %v77
    %v122 = vpop.f32.mrf.mxu0
    %v123 = vadd.f32 %v69, %v122
    %124 = vdwg.mxu0
    %125 = vst [vmem:[#allocation8] sm:$0xff] %v97
    %126 = vst [vmem:[#allocation8 + $0x8] sm:$0xff] %v120
    %127 = vst [vmem:[#allocation8 + $0x10] sm:$0xff] %v100
    %128 = vst [vmem:[#allocation8 + $0x18] sm:$0xff] %v123
    // Predicated region
    $region26: #{tpu_custom_call.1} parent=1 // pred_check
      _
    $region27: #{tpu_custom_call.1} parent=1 // pred_check_branch
      %130 = sbr.rel (0) target = $region29
    $region28: #{tpu_custom_call.1} parent=1 // pred_region
      %132 = vsyncadd [#allocation4], 0
      %s133 = sshll.u32 [#allocation8], 4
      %s134 = int_to_ptr.vmem [resolvable:$true] %s133
      %s135 = sshll.u32 %s3, 4
      %s136 = int_to_ptr.hbm [resolvable:$true] %s135
      %141 = dma.vmem_to_hbm [thread:$0]  %s134, 512, %s136, [#allocation4], 256, 256, 16
    $region29: #{tpu_custom_call.1} parent=1 // pred_fallthru
      _
    // Predicated region
    $region30: #{tpu_custom_call.1} parent=1 // pred_check
      _
    $region31: #{tpu_custom_call.1} parent=1 // pred_check_branch
      %143 = sbr.rel (0) target = $region33
    $region32: #{tpu_custom_call.1} parent=1 // pred_region
      %145 = dma.done [#allocation4], 512
    $region33: #{tpu_custom_call.1} parent=1 // pred_fallthru
      _
    %146 = vsyncpa [#allocation3], 1
    %147 = vsyncpa [#allocation6], 1
    %148 = vsyncpa [#allocation4], 1

</llo_original>
